<compile_context>
chip_gen: v7x
topology: tpu7x:2x2x1
jax: 0.10.0
libtpu: 0.0.40
codegen_flags: <defaults>
</compile_context>

<pallas_src>
import jax
import jax.numpy as jnp
from jax import lax
from jax.experimental import pallas as pl
from jax.experimental.pallas import tpu as pltpu


# ---------------------------------------------------------------------------
# Kernel 1: fused  Linear -> (folded) BatchNorm -> ReLU  over a tile of rows.
# ---------------------------------------------------------------------------
def _linear_bn_relu_kernel(x_ref, w_ref, b_ref, o_ref):
    y = jnp.dot(x_ref[...], w_ref[...], preferred_element_type=jnp.float32)
    y = y + b_ref[...]
    o_ref[...] = jnp.maximum(y, 0.0).astype(o_ref.dtype)


def linear_bn_relu(x2d, w_eff, b_eff, *, tile_rows=512):
    rows, din = x2d.shape
    dout = w_eff.shape[1]
    t = min(tile_rows, rows)
    if rows % t != 0 or t % 8 != 0:
        t = rows  # fall back to one full-extent block
    return pl.pallas_call(
        _linear_bn_relu_kernel,
        out_shape=jax.ShapeDtypeStruct((rows, dout), x2d.dtype),
        grid_spec=pltpu.PrefetchScalarGridSpec(
            num_scalar_prefetch=0,
            grid=(pl.cdiv(rows, t),),
            in_specs=[
                pl.BlockSpec((t, din), lambda i: (i, 0)),     # activation rows
                pl.BlockSpec((din, dout), lambda i: (0, 0)),  # fused W (resident)
                pl.BlockSpec((1, dout), lambda i: (0, 0)),    # fused bias
            ],
            out_specs=pl.BlockSpec((t, dout), lambda i: (i, 0)),
        ),
        compiler_params=pltpu.CompilerParams(
            dimension_semantics=("parallel",)),
    )(x2d, w_eff, b_eff)


# ---------------------------------------------------------------------------
# Kernel 2: fused  fc2 (Linear+BN+ReLU)  +  3-NN upsample of h1  +  add.
# ---------------------------------------------------------------------------
def _transition_up_kernel(pos2_ref, pos1t_ref, h1_ref, feat2_ref,
                          w2_ref, b2_ref, o_ref):
    pos2 = pos2_ref[0]            # (tile, Cp)   fine-point coords
    p1t = pos1t_ref[0]            # (Cp, N1)     coarse-point coords, transposed
    h1 = h1_ref[0]                # (N1, dout)   fc1 output (coarse)
    feat2 = feat2_ref[0]          # (tile, dim2) fine-point features

    # ---- fc2 branch: Linear + folded BN + ReLU on the MXU ----
    h2 = jnp.dot(feat2, w2_ref[...], preferred_element_type=jnp.float32)
    h2 = jnp.maximum(h2 + b2_ref[...], 0.0)

    # ---- squared distances (same formula as square_distance) ----
    d = (-2.0 * jnp.dot(pos2, p1t, preferred_element_type=jnp.float32)
         + jnp.sum(pos2 * pos2, axis=-1, keepdims=True)
         + jnp.sum(p1t * p1t, axis=0)[None, :])              # (tile, N1)

    # ---- 3-NN inverse-distance weights as a lane-dense sparse matrix ----
    n_src = d.shape[1]
    colf = lax.broadcasted_iota(jnp.float32, d.shape, 1)
    d_work = d
    w_sparse = jnp.zeros_like(d)
    recip_sum = jnp.zeros((d.shape[0], 1), jnp.float32)
    for _ in range(3):                                       # unrolled: 3 neighbours
        min_val = jnp.min(d_work, axis=-1, keepdims=True)
        first = jnp.min(jnp.where(d_work == min_val, colf, float(n_src)),
                        axis=-1, keepdims=True)
        hit = colf == first
        recip = 1.0 / (min_val + 1e-8)
        w_sparse = w_sparse + jnp.where(hit, recip, 0.0)
        recip_sum = recip_sum + recip
        d_work = jnp.where(hit, jnp.inf, d_work)
    w_sparse = w_sparse / recip_sum                          # normalized 3-NN weights

    # gather + weighted sum == one MXU matmul: (tile, N1) @ (N1, dout)
    interp = jnp.dot(w_sparse, h1, preferred_element_type=jnp.float32)

    o_ref[0] = (interp + h2).astype(o_ref.dtype)


# ---------------------------------------------------------------------------
# Wrapper
# ---------------------------------------------------------------------------
def fold_linear_bn(w, b, gamma, beta, mean, var, eps=1e-5):
    """Fold inference-mode BatchNorm1d into the preceding Linear."""
    s = gamma / jnp.sqrt(var + eps)
    w_eff = w * s[None, :]
    b_eff = ((b - mean) * s + beta).reshape(1, -1)
    return w_eff, b_eff


def transition_up_forward(pos1, feat1, pos2, feat2, params, *,
                          tile_n=256, tile_rows=512):
    """pos1:(B,N1,C) feat1:(B,N1,dim1)  pos2:(B,N2,C) feat2:(B,N2,dim2) -> (B,N2,dout)"""
    B, N1, C = pos1.shape
    _, N2, _ = pos2.shape
    dim1 = feat1.shape[-1]
    dim2 = feat2.shape[-1]

    w1e, b1e = fold_linear_bn(params["w1"], params["b1"], params["g1"],
                              params["beta1"], params["m1"], params["v1"])
    w2e, b2e = fold_linear_bn(params["w2"], params["b2"], params["g2"],
                              params["beta2"], params["m2"], params["v2"])
    dout = w1e.shape[1]

    # fc1 branch over all coarse points (fused Linear+BN+ReLU kernel).
    h1 = linear_bn_relu(feat1.reshape(B * N1, dim1), w1e, b1e,
                        tile_rows=tile_rows).reshape(B, N1, dout)

    # Pad coordinate dim to 8 lanes (zeros do not change distances) and
    # pre-transpose pos1 so the in-kernel distance is a plain MXU matmul.
    cp = max(8, -(-C // 8) * 8)
    pos2_p = jnp.pad(pos2, ((0, 0), (0, 0), (0, cp - C)))
    pos1t_p = jnp.pad(jnp.swapaxes(pos1, 1, 2), ((0, 0), (0, cp - C), (0, 0)))

    t = min(tile_n, N2)
    if N2 % t != 0 or t % 8 != 0:
        t = N2

    out = pl.pallas_call(
        _transition_up_kernel,
        out_shape=jax.ShapeDtypeStruct((B, N2, dout), feat2.dtype),
        grid_spec=pltpu.PrefetchScalarGridSpec(
            num_scalar_prefetch=0,
            grid=(B, pl.cdiv(N2, t)),
            in_specs=[
                pl.BlockSpec((1, t, cp), lambda b, i: (b, i, 0)),     # pos2 tile
                pl.BlockSpec((1, cp, N1), lambda b, i: (b, 0, 0)),    # pos1^T (per-batch resident)
                pl.BlockSpec((1, N1, dout), lambda b, i: (b, 0, 0)),  # h1 (per-batch resident)
                pl.BlockSpec((1, t, dim2), lambda b, i: (b, i, 0)),   # feat2 tile
                pl.BlockSpec((dim2, dout), lambda b, i: (0, 0)),      # fused W2
                pl.BlockSpec((1, dout), lambda b, i: (0, 0)),         # fused b2
            ],
            out_specs=pl.BlockSpec((1, t, dout), lambda b, i: (b, i, 0)),
        ),
        compiler_params=pltpu.CompilerParams(
            dimension_semantics=("parallel", "parallel")),
    )(pos2_p, pos1t_p, h1, feat2, w2e, b2e)
    return out


if __name__ == "__main__":
    # Small shapes: coarse branch (pos1/feat1), fine branch (pos2/feat2).
    B, N1, N2, C = 2, 16, 64, 3
    dim1, dim2, dout = 32, 16, 32

    key = jax.random.PRNGKey(0)
    ks = jax.random.split(key, 16)

    pos1 = jax.random.normal(ks[0], (B, N1, C), jnp.float32)
    feat1 = jax.random.normal(ks[1], (B, N1, dim1), jnp.float32)
    pos2 = jax.random.normal(ks[2], (B, N2, C), jnp.float32)
    feat2 = jax.random.normal(ks[3], (B, N2, dim2), jnp.float32)

    def lin_init(k, din, dn):
        kw, kb = jax.random.split(k)
        lim = 1.0 / jnp.sqrt(din)
        w = jax.random.uniform(kw, (din, dn), jnp.float32, -lim, lim)
        b = jax.random.uniform(kb, (dn,), jnp.float32, -lim, lim)
        return w, b

    w1, b1 = lin_init(ks[4], dim1, dout)
    w2, b2 = lin_init(ks[5], dim2, dout)

    params = dict(
        w1=w1, b1=b1,
        g1=jax.random.uniform(ks[6], (dout,), jnp.float32, 0.5, 1.5),
        beta1=jax.random.normal(ks[7], (dout,), jnp.float32) * 0.1,
        m1=jax.random.normal(ks[8], (dout,), jnp.float32) * 0.1,
        v1=jax.random.uniform(ks[9], (dout,), jnp.float32, 0.5, 1.5),
        w2=w2, b2=b2,
        g2=jax.random.uniform(ks[10], (dout,), jnp.float32, 0.5, 1.5),
        beta2=jax.random.normal(ks[11], (dout,), jnp.float32) * 0.1,
        m2=jax.random.normal(ks[12], (dout,), jnp.float32) * 0.1,
        v2=jax.random.uniform(ks[13], (dout,), jnp.float32, 0.5, 1.5),
    )

    out = transition_up_forward(pos1, feat1, pos2, feat2, params,
                                tile_n=32, tile_rows=128)
    jax.block_until_ready(out)

    # ---- plain-JAX reference mirroring the PyTorch forward (eval-mode BN) ----
    def fc_ref(x, w, b, g, be, m, v, eps=1e-5):
        y = x @ w + b
        y = g * (y - m) / jnp.sqrt(v + eps) + be
        return jax.nn.relu(y)

    h1_r = fc_ref(feat1, params["w1"], params["b1"], params["g1"],
                  params["beta1"], params["m1"], params["v1"])
    h2_r = fc_ref(feat2, params["w2"], params["b2"], params["g2"],
                  params["beta2"], params["m2"], params["v2"])
    d = (-2.0 * jnp.einsum("bnc,bmc->bnm", pos2, pos1)
         + jnp.sum(pos2 ** 2, -1)[:, :, None]
         + jnp.sum(pos1 ** 2, -1)[:, None, :])
    idx = jnp.argsort(d, axis=-1)[:, :, :3]
    dists = jnp.take_along_axis(d, idx, axis=-1)
    recip = 1.0 / (dists + 1e-8)
    weight = recip / jnp.sum(recip, axis=-1, keepdims=True)
    gathered = jax.vmap(lambda f, i: f[i])(h1_r, idx)           # (B, N2, 3, dout)
    interp = jnp.sum(gathered * weight[..., None], axis=2)
    ref = interp + h2_r

    assert out.shape == (B, N2, dout)
    assert jnp.allclose(out, ref, atol=1e-3, rtol=1e-3), \
        float(jnp.max(jnp.abs(out - ref)))

    print("KERNEL_OK")
</pallas_src>

<mosaic_0001>
module attributes {stable_mosaic.version = 11 : i64} {
  func.func @_linear_bn_relu_kernel(%arg0: i32, %arg1: memref<32x32xf32, #tpu.memory_space<vmem>>, %arg2: memref<32x32xf32, #tpu.memory_space<vmem>>, %arg3: memref<1x32xf32, #tpu.memory_space<vmem>>, %arg4: memref<32x32xf32, #tpu.memory_space<vmem>>) attributes {dimension_semantics = [#tpu.dimension_semantics<parallel>], iteration_bounds = array<i64: 1>, scalar_prefetch = 0 : i64, scratch_operands = 0 : i64, tpu.core_type = #tpu.core_type<tc>, window_params = [{transform_indices = @transform_0, window_bounds = array<i64: 32, 32>}, {pipeline_mode = #tpu.pipeline_mode<synchronous>, transform_indices = @transform_1, window_bounds = array<i64: 32, 32>}, {pipeline_mode = #tpu.pipeline_mode<synchronous>, transform_indices = @transform_2, window_bounds = array<i64: 1, 32>}, {transform_indices = @transform_3, window_bounds = array<i64: 32, 32>}]} {
    %c0 = arith.constant 0 : index
    %c0_0 = arith.constant 0 : index
    %0 = vector.load %arg1[%c0, %c0_0] : memref<32x32xf32, #tpu.memory_space<vmem>>, vector<32x32xf32>
    %c0_1 = arith.constant 0 : index
    %c0_2 = arith.constant 0 : index
    %1 = vector.load %arg2[%c0_1, %c0_2] : memref<32x32xf32, #tpu.memory_space<vmem>>, vector<32x32xf32>
    %cst = arith.constant dense<0.000000e+00> : vector<32x32xf32>
    %2 = tpu.matmul %0, %1, %cst {dimension_numbers = #tpu.dot_dimension_numbers<[1], [0], [0], [1], [0, 0, 1, 1], [], []>} : vector<32x32xf32>, vector<32x32xf32>, vector<32x32xf32> -> vector<32x32xf32>
    %c0_3 = arith.constant 0 : index
    %c0_4 = arith.constant 0 : index
    %3 = vector.load %arg3[%c0_3, %c0_4] : memref<1x32xf32, #tpu.memory_space<vmem>>, vector<1x32xf32>
    %4 = vector.broadcast %3 : vector<1x32xf32> to vector<32x32xf32>
    %5 = arith.addf %2, %4 : vector<32x32xf32>
    %cst_5 = arith.constant 0.000000e+00 : f32
    %6 = vector.broadcast %cst_5 : f32 to vector<32x32xf32>
    %7 = arith.maximumf %5, %6 : vector<32x32xf32>
    %c0_6 = arith.constant 0 : index
    %c0_7 = arith.constant 0 : index
    %8 = vector.load %arg4[%c0_6, %c0_7] : memref<32x32xf32, #tpu.memory_space<vmem>>, vector<32x32xf32>
    tpu.vector_store %arg4[%c0_6, %c0_7], %7 {strides = array<i32>} : memref<32x32xf32, #tpu.memory_space<vmem>>, vector<32x32xf32>,
    return
  }
  func.func @transform_0(%arg0: i32) -> (i32, i32) {
    %c0_i32 = arith.constant 0 : i32
    %c0_i32_0 = arith.constant 0 : i32
    return %arg0, %c0_i32 : i32, i32
  }
  func.func @transform_1(%arg0: i32) -> (i32, i32) {
    %c0_i32 = arith.constant 0 : i32
    %c0_i32_0 = arith.constant 0 : i32
    %c0_i32_1 = arith.constant 0 : i32
    return %c0_i32, %c0_i32_0 : i32, i32
  }
  func.func @transform_2(%arg0: i32) -> (i32, i32) {
    %c0_i32 = arith.constant 0 : i32
    %c0_i32_0 = arith.constant 0 : i32
    %c0_i32_1 = arith.constant 0 : i32
    return %c0_i32, %c0_i32_0 : i32, i32
  }
  func.func @transform_3(%arg0: i32) -> (i32, i32) {
    %c0_i32 = arith.constant 0 : i32
    %c0_i32_0 = arith.constant 0 : i32
    return %arg0, %c0_i32 : i32, i32
  }
}

</mosaic_0001>

<llo_original>
// kernel: tpu_custom_call.1
$region0: #{tpu_custom_call.1}
  #allocation0 [shape = 'u32[]', space=smem, size = 0x4, offset = 0x4, fixed_abs, tag = 'smem constant byte address 0x4 - core index']
  #allocation1 [shape = 'u32[144,128]{1,0:T(1,128)}', space=vmem, size = 0x12000, scoped, tag = 'internal scratch']
  %s0 = inlined_call_operand.hbm [shape: f32[32,32], index: 0, kind: input, shape index: {}]
  %s1 = inlined_call_operand.hbm [shape: f32[32,32], index: 1, kind: input, shape index: {}]
  %s2 = inlined_call_operand.vmem [shape: f32[1,32], index: 2, kind: input, shape index: {}]
  %s3 = inlined_call_operand.hbm [shape: f32[32,32], index: 3, kind: output, shape index: {}]
  %s4 = sld [smem:[#allocation0]]
  $region30: #{tpu_custom_call.1} parent=0
    _
  %s6 = ssub.s32 1, %s4
  %s7 = scalar_select 0, %s6, %s4
  $region1: #{tpu_custom_call.1} parent=0
    #allocation2 [shape = 'u8[16384]{0}', space=vmem, size = 0x4000, scoped, tag = 'input window, operand 0, single buffered']
    #allocation3 [shape = 's32[1]{0}', space=sflag, size = 0x4, scoped, tag = 'scoped memory for tpu_custom_call.1']
    #allocation4 [shape = 's32[1]{0}', space=sflag, size = 0x4, scoped, tag = 'scoped memory for tpu_custom_call.1']
    #allocation5 [shape = 'u8[16384]{0}', space=vmem, size = 0x4000, scoped, tag = 'input window, operand 1, single buffered']
    #allocation6 [shape = 's32[1]{0}', space=sflag, size = 0x4, scoped, tag = 'scoped memory for tpu_custom_call.1']
    #allocation7 [shape = 'u8[16384]{0}', space=vmem, size = 0x4000, scoped, tag = 'output window, operand 0, single buffered']
    %8 = vsyncpa [#allocation3], 0
    %9 = vsyncpa [#allocation6], 0
    %10 = vsyncpa [#allocation4], 0
    // Predicated region
    $region2: #{tpu_custom_call.1} parent=1 // pred_check
      _
    $region3: #{tpu_custom_call.1} parent=1 // pred_check_branch
      %12 = sbr.rel (0) target = $region5
    $region4: #{tpu_custom_call.1} parent=1 // pred_region
      %s14 = ssub.s32 512, 512
      %15 = vsyncadd [#allocation3], %s14
      %s16 = sshll.u32 [#allocation2], 4
      %s17 = int_to_ptr.vmem [resolvable:$true] %s16
      %22 = dma.hbm_to_vmem [thread:$0]  %s0, 512, %s17, [#allocation3], 128, 128, 8
    $region5: #{tpu_custom_call.1} parent=1 // pred_fallthru
      _
    // Predicated region
    $region6: #{tpu_custom_call.1} parent=1 // pred_check
      _
    $region7: #{tpu_custom_call.1} parent=1 // pred_check_branch
      %24 = sbr.rel (0) target = $region9
    $region8: #{tpu_custom_call.1} parent=1 // pred_region
      %s26 = ssub.s32 512, 512
      %27 = vsyncadd [#allocation6], %s26
      %s28 = sshll.u32 [#allocation5], 4
      %s29 = int_to_ptr.vmem [resolvable:$true] %s28
      %34 = dma.hbm_to_vmem [thread:$0]  %s1, 512, %s29, [#allocation6], 128, 128, 8
    $region9: #{tpu_custom_call.1} parent=1 // pred_fallthru
      _
    // Predicated region
    $region10: #{tpu_custom_call.1} parent=1 // pred_check
      _
    $region11: #{tpu_custom_call.1} parent=1 // pred_check_branch
      %36 = sbr.rel (0) target = $region13
    $region12: #{tpu_custom_call.1} parent=1 // pred_region
      _
    $region13: #{tpu_custom_call.1} parent=1 // pred_fallthru
      _
    // Predicated region
    $region14: #{tpu_custom_call.1} parent=1 // pred_check
      _
    $region15: #{tpu_custom_call.1} parent=1 // pred_check_branch
      %38 = sbr.rel (0) target = $region17
    $region16: #{tpu_custom_call.1} parent=1 // pred_region
      %39 = dma.done [#allocation3], 512
    $region17: #{tpu_custom_call.1} parent=1 // pred_fallthru
      _
    // Predicated region
    $region18: #{tpu_custom_call.1} parent=1 // pred_check
      _
    $region19: #{tpu_custom_call.1} parent=1 // pred_check_branch
      %41 = sbr.rel (0) target = $region21
    $region20: #{tpu_custom_call.1} parent=1 // pred_region
      %42 = dma.done [#allocation6], 512
    $region21: #{tpu_custom_call.1} parent=1 // pred_fallthru
      _
    %v43 = vld [vmem:[#allocation2] sm:$0xff]
    %v44 = vld [vmem:[#allocation2 + $0x8] sm:$0xff]
    %v45 = vld [vmem:[#allocation2 + $0x10] sm:$0xff]
    %v46 = vld [vmem:[#allocation2 + $0x18] sm:$0xff]
    %v47 = vld [vmem:[#allocation5] sm:$0xff]
    %v48 = vld [vmem:[#allocation5 + $0x8] sm:$0xff]
    %v49 = vld [vmem:[#allocation5 + $0x10] sm:$0xff]
    %v50 = vld [vmem:[#allocation5 + $0x18] sm:$0xff]
    %v51 = vld [vmem:[%s2] sm:$0x1]
    %v53 = vlaneseq
    %v54 = vshrl.u32 %v53, 7
    %v55 = vsub.s32 0, %v54
    %v56 = vrot.slane %v51, %v55
    %vm58 = vcmask 261120
    %v60 = vsel %vm58, %v43, 0
    %v63 = vsel %vm58, %v44, 0
    %v66 = vsel %vm58, %v45, 0
    %v69 = vsel %vm58, %v46, 0
    %71 = vmatprep.subr.mxu0 0.0
    %72 = vmatpush1.msra.mxu0 %v47
    %73 = vmatprep.subr.mxu0 0.0
    %74 = vmatpush1.msra.mxu0 %v48
    %75 = vmatprep.subr.mxu0 0.0
    %76 = vmatpush1.msra.mxu0 %v49
    %77 = vmatprep.subr.mxu0 0.0
    %78 = vmatpush1.msra.mxu0 %v50
    %79 = vmatprep.subr.mxu0 0.0
    %80 = vmatpush1.msra.mxu0 0.0
    %81 = vmatprep.subr.mxu0 0.0
    %82 = vmatpush1.msra.mxu0 0.0
    %83 = vmatprep.subr.mxu0 0.0
    %84 = vmatpush1.msra.mxu0 0.0
    %85 = vmatprep.subr.mxu0 0.0
    %86 = vmatpush1.msra.mxu0 0.0
    %87 = vmatprep.subr.mxu0 0.0
    %88 = vmatpush1.msra.mxu0 0.0
    %89 = vmatprep.subr.mxu0 0.0
    %90 = vmatpush1.msra.mxu0 0.0
    %91 = vmatprep.subr.mxu0 0.0
    %92 = vmatpush1.msra.mxu0 0.0
    %93 = vmatprep.subr.mxu0 0.0
    %94 = vmatpush1.msra.mxu0 0.0
    %95 = vmatprep.subr.mxu0 0.0
    %96 = vmatpush1.msra.mxu0 0.0
    %97 = vmatprep.subr.mxu0 0.0
    %98 = vmatpush1.msra.mxu0 0.0
    %99 = vmatprep.subr.mxu0 0.0
    %100 = vmatpush1.msra.mxu0 0.0
    %101 = vmatprep.subr.mxu0 0.0
    %102 = vmatpush1.msra.mxu0 0.0
    %103 = vmatprep.subr.mxu0 0.0
    %104 = vmatpush1.msra.mxu0 0.0
    %105 = vmatprep.subr.mxu0 0.0
    %106 = vmatpush1.msra.mxu0 0.0
    %107 = vmatprep.subr.mxu0 0.0
    %108 = vmatpush1.msra.mxu0 0.0
    %109 = vmatprep.subr.mxu0 0.0
    %110 = vmatpush1.msra.mxu0 0.0
    %111 = vmatprep.subr.mxu0 0.0
    %112 = vmatpush1.msra.mxu0 0.0
    %113 = vmatprep.subr.mxu0 0.0
    %114 = vmatpush1.msra.mxu0 0.0
    %115 = vmatprep.subr.mxu0 0.0
    %116 = vmatpush1.msra.mxu0 0.0
    %117 = vmatprep.subr.mxu0 0.0
    %118 = vmatpush1.msra.mxu0 0.0
    %119 = vmatprep.subr.mxu0 0.0
    %120 = vmatpush1.msra.mxu0 0.0
    %121 = vmatprep.subr.mxu0 0.0
    %122 = vmatpush1.msra.mxu0 0.0
    %123 = vmatprep.subr.mxu0 0.0
    %124 = vmatpush1.msra.mxu0 0.0
    %125 = vmatprep.subr.mxu0 0.0
    %126 = vmatpush1.msra.mxu0 0.0
    %127 = vmatprep.subr.mxu0 0.0
    %128 = vmatpush1.msra.mxu0 0.0
    %129 = vmatprep.subr.mxu0 0.0
    %130 = vmatpush1.msra.mxu0 0.0
    %131 = vmatprep.subr.mxu0 0.0
    %132 = vmatpush1.msra.mxu0 0.0
    %133 = vmatprep.subr.mxu0 0.0
    %134 = vmatpush1.msra.mxu0 0.0
    %135 = vmatprep.mubr.f32.mxu0 0.0
    %136 = vmatmul.mubr.f32.gmra.mrb[0].mxu0 %v60
    %v137 = vpop.f32.mrb[0].mxu0
    %v138 = vadd.f32 %v56, %v137
    %v139 = vpop.f32.mrb[0].mxu0
    %140 = vmatprep.mubr.f32.mxu0 0.0
    %141 = vmatmul.mubr.f32.gmra.mrb[0].mxu0 %v63
    %v142 = vpop.f32.mrb[0].mxu0
    %v143 = vadd.f32 %v56, %v142
    %v144 = vpop.f32.mrb[0].mxu0
    %145 = vmatprep.mubr.f32.mxu0 0.0
    %146 = vmatmul.mubr.f32.gmra.mrb[0].mxu0 %v66
    %v147 = vpop.f32.mrb[0].mxu0
    %v148 = vadd.f32 %v56, %v147
    %v149 = vpop.f32.mrb[0].mxu0
    %150 = vmatprep.mubr.f32.mxu0 0.0
    %151 = vmatmul.mubr.f32.gmra.mrb[0].mxu0 %v69
    %v152 = vpop.f32.mrb[0].mxu0
    %v153 = vadd.f32 %v56, %v152
    %v154 = vpop.f32.mrb[0].mxu0
    %155 = vdwg.mxu0
    %v156 = vmax.f32 %v138, 0.0
    %v157 = vmax.f32 %v143, 0.0
    %v158 = vmax.f32 %v148, 0.0
    %v159 = vmax.f32 %v153, 0.0
    %160 = vst.msk [vmem:[#allocation7] sm:$0xff] %vm58, %v156
    %161 = vst.msk [vmem:[#allocation7 + $0x8] sm:$0xff] %vm58, %v157
    %162 = vst.msk [vmem:[#allocation7 + $0x10] sm:$0xff] %vm58, %v158
    %163 = vst.msk [vmem:[#allocation7 + $0x18] sm:$0xff] %vm58, %v159
    // Predicated region
    $region22: #{tpu_custom_call.1} parent=1 // pred_check
      _
    $region23: #{tpu_custom_call.1} parent=1 // pred_check_branch
      %165 = sbr.rel (0) target = $region25
    $region24: #{tpu_custom_call.1} parent=1 // pred_region
      %s167 = ssub.s32 512, 512
      %168 = vsyncadd [#allocation4], %s167
      %s169 = sshll.u32 [#allocation7], 4
      %s170 = int_to_ptr.vmem [resolvable:$true] %s169
      %175 = dma.vmem_to_hbm [thread:$0]  %s170, 512, %s3, [#allocation4], 128, 128, 8
    $region25: #{tpu_custom_call.1} parent=1 // pred_fallthru
      _
    // Predicated region
    $region26: #{tpu_custom_call.1} parent=1 // pred_check
      _
    $region27: #{tpu_custom_call.1} parent=1 // pred_check_branch
      %177 = sbr.rel (0) target = $region29
    $region28: #{tpu_custom_call.1} parent=1 // pred_region
      %178 = dma.done [#allocation4], 512
    $region29: #{tpu_custom_call.1} parent=1 // pred_fallthru
      _
    %179 = vsyncpa [#allocation3], 1
    %180 = vsyncpa [#allocation6], 1
    %181 = vsyncpa [#allocation4], 1

</llo_original>
